<compile_context>
chip_gen: v7x
topology: tpu7x:2x2x1
jax: 0.10.0
libtpu: 0.0.40
codegen_flags: <defaults>
</compile_context>

<pallas_src>
import functools

import jax
import jax.numpy as jnp
from jax.experimental import pallas as pl
from jax.experimental.pallas import tpu as pltpu

LANES = 128                            # vreg lane width
SUBLANES = 8                           # vreg sublane count
TARGET_BLOCK_BYTES = 4 * 1024 * 1024   # per-grid-step DMA block (any dtype)
VMEM_LIMIT_BYTES = 32 * 1024 * 1024    # room for double-buffered 4 MiB blocks


@functools.lru_cache(maxsize=1)
def _num_tensorcores() -> int:
    """Best-effort TensorCores-per-JAX-device (megacore width)."""
    try:
        dev = jax.devices()[0]
        num = getattr(dev, "num_cores", None)
        if num:
            return max(1, int(num))
        kind = getattr(dev, "device_kind", "").lower()
        if any(tag in kind for tag in ("v4", "v5p", "v7")):
            return 2                   # megacore chips: 2 TCs per device
    except Exception:
        pass
    return 1                           # v5e / v6e: single TensorCore


def _fold_identities(dtype):
    """(lo, hi) identity values for max/min folds in `dtype` (exact)."""
    if jnp.issubdtype(dtype, jnp.floating):
        return float("-inf"), float("inf")
    if jnp.issubdtype(dtype, jnp.integer):
        info = jnp.iinfo(dtype)
        return int(info.min), int(info.max)
    return None                        # unsupported dtype -> pure-JAX fallback


def _minmax_kernel(x_ref, min_ref, max_ref, *,
                   rows_valid, steps_per_shard, lo, hi):
    """Streaming min/max over a lane-dense (rows, 128) slab.

    x_ref   : (block_rows, 128) tile, native dtype.
    min_ref : (1, 8, 128) per-shard minimum accumulator (native dtype).
    max_ref : (1, 8, 128) per-shard maximum accumulator (native dtype).
    rows_valid / steps_per_shard / lo / hi : static Python scalars.
    """
    i = pl.program_id(1)                       # inner ("arbitrary") axis

    @pl.when(i == 0)
    def _init():                               # per-shard accumulator init
        min_ref[...] = jnp.full(min_ref.shape, hi, min_ref.dtype)
        max_ref[...] = jnp.full(max_ref.shape, lo, max_ref.dtype)

    tile = x_ref[...]                          # native dtype, no widening
    block_rows = x_ref.shape[0]
    step = pl.program_id(0) * steps_per_shard + i
    start_row = step * block_rows              # row granularity: int32-safe

    def _fold(tmin, tmax):
        # (block_rows,128) -> (block_rows/8, 8, 128); reduce the leading
        # (non-layout) axis: pure VALU vmin/vmax, no cross-sublane XLU work.
        t3min = jnp.min(tmin.reshape(-1, SUBLANES, LANES), axis=0)
        t3max = jnp.max(tmax.reshape(-1, SUBLANES, LANES), axis=0)
        min_ref[0] = jnp.minimum(min_ref[0], t3min)
        max_ref[0] = jnp.maximum(max_ref[0], t3max)

    needs_mask = (start_row + block_rows) > rows_valid

    @pl.when(needs_mask)                       # ragged / duplicated block only
    def _masked():
        row = start_row + jax.lax.broadcasted_iota(jnp.int32, tile.shape, 0)
        valid = row < rows_valid
        _fold(jnp.where(valid, tile, jnp.asarray(hi, tile.dtype)),
              jnp.where(valid, tile, jnp.asarray(lo, tile.dtype)))

    @pl.when(jnp.logical_not(needs_mask))
    def _plain():
        _fold(tile, tile)


def _pallas_minmax(x):
    """Global (min, max) of `x` (any shape, float/int dtype) as f32 scalars."""
    flat = x.reshape(-1)                       # contiguous reshape: free bitcast
    n = flat.shape[0]
    dtype = flat.dtype
    ident = _fold_identities(dtype)

    rows = n // LANES
    if ident is None or rows < SUBLANES:
        # Unsupported dtype or tiny input (<1024 elems): plain JAX reduce.
        return (jnp.min(flat).astype(jnp.float32),
                jnp.max(flat).astype(jnp.float32))
    lo, hi = ident

    n_main = rows * LANES
    if n_main == n:
        main = flat                            # fully zero-copy path
    else:
        # TODO(synk): a prefix slice may still materialize a copy of the
        # 128-aligned prefix for ragged element counts; only the <128-element
        # tail is reduced outside the kernel.
        main = jax.lax.slice(flat, (0,), (n_main,))
    x2d = main.reshape(rows, LANES)            # free bitcast

    # Byte-budgeted block size (dtype-aware), multiple of 8 sublanes.
    target_rows = max(
        SUBLANES,
        (TARGET_BLOCK_BYTES // (LANES * dtype.itemsize)) // SUBLANES * SUBLANES)
    block_rows = min(target_rows, (rows // SUBLANES) * SUBLANES)

    total_steps = pl.cdiv(rows, block_rows)
    num_shards = min(_num_tensorcores(), total_steps)
    spp = pl.cdiv(total_steps, num_shards)     # inner steps per shard

    kernel = functools.partial(
        _minmax_kernel,
        rows_valid=rows, steps_per_shard=spp, lo=lo, hi=hi)

    data_spec = pl.BlockSpec(
        (block_rows, LANES),
        # Clamp so a shard's over-allocated trailing step re-reads the last
        # real block; re-folding is a no-op for min/max and the kernel also
        # masks rows >= rows_valid.
        lambda c, i: (jnp.minimum(c * spp + i, total_steps - 1), 0))

    acc_spec = pl.BlockSpec((1, SUBLANES, LANES), lambda c, i: (c, 0, 0))

    cost = pl.CostEstimate(
        flops=2 * n_main,
        transcendentals=0,
        bytes_accessed=n_main * dtype.itemsize
        + 2 * num_shards * SUBLANES * LANES * dtype.itemsize)

    part_min, part_max = pl.pallas_call(
        kernel,
        out_shape=(jax.ShapeDtypeStruct((num_shards, SUBLANES, LANES), dtype),
                   jax.ShapeDtypeStruct((num_shards, SUBLANES, LANES), dtype)),
        grid_spec=pltpu.PrefetchScalarGridSpec(
            num_scalar_prefetch=0,
            grid=(num_shards, spp),
            in_specs=[data_spec],
            out_specs=(acc_spec, acc_spec)),
        compiler_params=pltpu.CompilerParams(
            dimension_semantics=("parallel", "arbitrary"),
            vmem_limit_bytes=VMEM_LIMIT_BYTES),
        cost_estimate=cost,
    )(x2d)

    # Tiny epilogue: combine per-shard (8,128) partials; cast to f32 here
    # (exact for floats; ints with |x| > 2^24 lose low bits, same as v1).
    mn = jnp.min(part_min).astype(jnp.float32)
    mx = jnp.max(part_max).astype(jnp.float32)

    if n_main != n:                            # <128-element ragged tail
        tail = jax.lax.slice(flat, (n_main,), (n,))
        mn = jnp.minimum(mn, jnp.min(tail).astype(jnp.float32))
        mx = jnp.maximum(mx, jnp.max(tail).astype(jnp.float32))
    return mn, mx


@functools.partial(jax.jit, static_argnames=("decay", "initialized"))
def _ema_minmax_update(x, prev_min, prev_max, *, decay, initialized):
    cur_min, cur_max = _pallas_minmax(x)
    if initialized:
        cur_min = prev_min * decay + cur_min * (1.0 - decay)
        cur_max = prev_max * decay + cur_max * (1.0 - decay)
    return cur_min, cur_max


class EMAActivationRangeTracker:
    """JAX/Pallas port of the PyTorch EMAActivationRangeTracker."""

    def __init__(self, decay=0.9):
        self.min = None
        self.max = None
        self.decay = float(decay)

    def __call__(self, tensor):
        initialized = self.min is not None
        prev_min = self.min if initialized else jnp.float32(0.0)
        prev_max = self.max if initialized else jnp.float32(0.0)
        new_min, new_max = _ema_minmax_update(
            tensor, prev_min, prev_max,
            decay=self.decay, initialized=initialized)
        self.min, self.max = new_min, new_max
        return self.min, self.max


def _reference(xs, decay=0.9):
    mn = mx = None
    for x in xs:
        tmin, tmax = jnp.min(x), jnp.max(x)
        if mn is None:
            mn, mx = tmin, tmax
        else:
            mn = mn * decay + tmin * (1 - decay)
            mx = mx * decay + tmax * (1 - decay)
    return mn, mx


if __name__ == "__main__":
    key = jax.random.PRNGKey(0)
    k1, k2, k3, k4 = jax.random.split(key, 4)

    # 1) Small NCHW activations: first call (direct min/max) + EMA update.
    x1 = jax.random.normal(k1, (2, 4, 16, 16), dtype=jnp.float32)
    x2 = jax.random.normal(k2, (2, 4, 16, 16), dtype=jnp.float32) * 2.0 + 0.5

    tracker = EMAActivationRangeTracker(decay=0.9)
    tracker(x1)                        # first call: direct min/max
    mn, mx = tracker(x2)               # second call: EMA update
    mn, mx = jax.block_until_ready((mn, mx))
    ref_mn, ref_mx = _reference([x1, x2], decay=0.9)
    assert jnp.allclose(mn, ref_mn, rtol=1e-5, atol=1e-5), (mn, ref_mn)
    assert jnp.allclose(mx, ref_mx, rtol=1e-5, atol=1e-5), (mx, ref_mx)

    # 2) Ragged element count (exercises the in-kernel row mask + tail fold).
    x3 = jax.random.normal(k3, (3, 5, 7, 11), dtype=jnp.float32) - 3.0
    t2 = EMAActivationRangeTracker(decay=0.9)
    mn3, mx3 = jax.block_until_ready(t2(x3))
    assert jnp.allclose(mn3, jnp.min(x3), rtol=1e-6, atol=1e-6), (mn3, jnp.min(x3))
    assert jnp.allclose(mx3, jnp.max(x3), rtol=1e-6, atol=1e-6), (mx3, jnp.max(x3))

    # 3) Larger 128-aligned activation (fully zero-copy streaming path).
    x4 = jax.random.normal(k4, (4, 32, 48, 48), dtype=jnp.float32) * 1.7
    t3 = EMAActivationRangeTracker(decay=0.9)
    mn4, mx4 = jax.block_until_ready(t3(x4))
    assert jnp.allclose(mn4, jnp.min(x4), rtol=1e-6, atol=1e-6), (mn4, jnp.min(x4))
    assert jnp.allclose(mx4, jnp.max(x4), rtol=1e-6, atol=1e-6), (mx4, jnp.max(x4))

    print("KERNEL_OK")
</pallas_src>

<mosaic_0001>
module attributes {stable_mosaic.version = 11 : i64} {
  func.func @_minmax_kernel(%arg0: i32, %arg1: i32, %arg2: memref<16x128xf32, #tpu.memory_space<vmem>>, %arg3: memref<1x8x128xf32, #tpu.memory_space<vmem>>, %arg4: memref<1x8x128xf32, #tpu.memory_space<vmem>>) attributes {dimension_semantics = [#tpu.dimension_semantics<parallel>, #tpu.dimension_semantics<arbitrary>], iteration_bounds = array<i64: 1, 1>, scalar_prefetch = 0 : i64, scratch_operands = 0 : i64, tpu.core_type = #tpu.core_type<tc>, window_params = [{transform_indices = @transform_0, window_bounds = array<i64: 16, 128>}, {transform_indices = @transform_1, window_bounds = array<i64: 1, 8, 128>}, {transform_indices = @transform_2, window_bounds = array<i64: 1, 8, 128>}]} {
    %c0_i32 = arith.constant 0 : i32
    %0 = arith.cmpi eq, %arg1, %c0_i32 : i32
    %1 = arith.extui %0 : i1 to i32
    %c0_i32_0 = arith.constant 0 : i32
    %2 = arith.cmpi ne, %1, %c0_i32_0 : i32
    scf.if %2 {
      %cst = arith.constant 0x7F800000 : f32
      %14 = vector.broadcast %cst : f32 to vector<1x8x128xf32>
      %c0_6 = arith.constant 0 : index
      %c0_7 = arith.constant 0 : index
      %c0_8 = arith.constant 0 : index
      %15 = vector.load %arg3[%c0_6, %c0_7, %c0_8] : memref<1x8x128xf32, #tpu.memory_space<vmem>>, vector<1x8x128xf32>
      tpu.vector_store %arg3[%c0_6, %c0_7, %c0_8], %14 {strides = array<i32>} : memref<1x8x128xf32, #tpu.memory_space<vmem>>, vector<1x8x128xf32>,
      %cst_9 = arith.constant 0xFF800000 : f32
      %16 = vector.broadcast %cst_9 : f32 to vector<1x8x128xf32>
      %c0_10 = arith.constant 0 : index
      %c0_11 = arith.constant 0 : index
      %c0_12 = arith.constant 0 : index
      %17 = vector.load %arg4[%c0_10, %c0_11, %c0_12] : memref<1x8x128xf32, #tpu.memory_space<vmem>>, vector<1x8x128xf32>
      tpu.vector_store %arg4[%c0_10, %c0_11, %c0_12], %16 {strides = array<i32>} : memref<1x8x128xf32, #tpu.memory_space<vmem>>, vector<1x8x128xf32>,
    } else {
    }
    %c0 = arith.constant 0 : index
    %c0_1 = arith.constant 0 : index
    %3 = vector.load %arg2[%c0, %c0_1] : memref<16x128xf32, #tpu.memory_space<vmem>>, vector<16x128xf32>
    %c1_i32 = arith.constant 1 : i32
    %4 = arith.muli %arg0, %c1_i32 : i32
    %5 = arith.addi %4, %arg1 : i32
    %c16_i32 = arith.constant 16 : i32
    %6 = arith.muli %5, %c16_i32 : i32
    %c16_i32_2 = arith.constant 16 : i32
    %7 = arith.addi %6, %c16_i32_2 : i32
    %c16_i32_3 = arith.constant 16 : i32
    %8 = arith.cmpi sgt, %7, %c16_i32_3 : i32
    %9 = arith.extui %8 : i1 to i32
    %c0_i32_4 = arith.constant 0 : i32
    %10 = arith.cmpi ne, %9, %c0_i32_4 : i32
    scf.if %10 {
      %14 = tpu.iota {dimensions = array<i32: 0>} : vector<16x128xi32>
      %15 = vector.broadcast %6 : i32 to vector<16x128xi32>
      %16 = arith.addi %15, %14 : vector<16x128xi32>
      %c16_i32_6 = arith.constant 16 : i32
      %17 = vector.broadcast %c16_i32_6 : i32 to vector<16x128xi32>
      %18 = arith.cmpi slt, %16, %17 : vector<16x128xi32>
      %cst = arith.constant 0x7F800000 : f32
      %19 = vector.broadcast %cst : f32 to vector<16x128xf32>
      %20 = arith.select %18, %3, %19 : vector<16x128xi1>, vector<16x128xf32>
      %cst_7 = arith.constant 0xFF800000 : f32
      %21 = vector.broadcast %cst_7 : f32 to vector<16x128xf32>
      %22 = arith.select %18, %3, %21 : vector<16x128xi1>, vector<16x128xf32>
      %23 = vector.shape_cast %20 : vector<16x128xf32> to vector<2x8x128xf32>
      %cst_8 = arith.constant dense<0x7F800000> : vector<8x128xf32>
      %24 = vector.multi_reduction <minimumf>, %23, %cst_8 [0] : vector<2x8x128xf32> to vector<8x128xf32>
      %25 = vector.shape_cast %22 : vector<16x128xf32> to vector<2x8x128xf32>
      %cst_9 = arith.constant dense<0xFF800000> : vector<8x128xf32>
      %26 = vector.multi_reduction <maximumf>, %25, %cst_9 [0] : vector<2x8x128xf32> to vector<8x128xf32>
      %c0_10 = arith.constant 0 : index
      %c0_11 = arith.constant 0 : index
      %c0_12 = arith.constant 0 : index
      %27 = vector.load %arg3[%c0_10, %c0_11, %c0_12] : memref<1x8x128xf32, #tpu.memory_space<vmem>>, vector<1x8x128xf32>
      %28 = vector.shape_cast %27 : vector<1x8x128xf32> to vector<8x128xf32>
      %29 = arith.minimumf %28, %24 : vector<8x128xf32>
      %c0_13 = arith.constant 0 : index
      %c0_14 = arith.constant 0 : index
      %c0_15 = arith.constant 0 : index
      %30 = vector.load %arg3[%c0_13, %c0_14, %c0_15] : memref<1x8x128xf32, #tpu.memory_space<vmem>>, vector<1x8x128xf32>
      %31 = vector.shape_cast %30 : vector<1x8x128xf32> to vector<8x128xf32>
      %32 = vector.shape_cast %29 : vector<8x128xf32> to vector<1x8x128xf32>
      tpu.vector_store %arg3[%c0_13, %c0_14, %c0_15], %32 {strides = array<i32>} : memref<1x8x128xf32, #tpu.memory_space<vmem>>, vector<1x8x128xf32>,
      %c0_16 = arith.constant 0 : index
      %c0_17 = arith.constant 0 : index
      %c0_18 = arith.constant 0 : index
      %33 = vector.load %arg4[%c0_16, %c0_17, %c0_18] : memref<1x8x128xf32, #tpu.memory_space<vmem>>, vector<1x8x128xf32>
      %34 = vector.shape_cast %33 : vector<1x8x128xf32> to vector<8x128xf32>
      %35 = arith.maximumf %34, %26 : vector<8x128xf32>
      %c0_19 = arith.constant 0 : index
      %c0_20 = arith.constant 0 : index
      %c0_21 = arith.constant 0 : index
      %36 = vector.load %arg4[%c0_19, %c0_20, %c0_21] : memref<1x8x128xf32, #tpu.memory_space<vmem>>, vector<1x8x128xf32>
      %37 = vector.shape_cast %36 : vector<1x8x128xf32> to vector<8x128xf32>
      %38 = vector.shape_cast %35 : vector<8x128xf32> to vector<1x8x128xf32>
      tpu.vector_store %arg4[%c0_19, %c0_20, %c0_21], %38 {strides = array<i32>} : memref<1x8x128xf32, #tpu.memory_space<vmem>>, vector<1x8x128xf32>,
    } else {
    }
    %true = arith.constant true
    %11 = arith.xori %8, %true : i1
    %12 = arith.extui %11 : i1 to i32
    %c0_i32_5 = arith.constant 0 : i32
    %13 = arith.cmpi ne, %12, %c0_i32_5 : i32
    scf.if %13 {
      %14 = vector.shape_cast %3 : vector<16x128xf32> to vector<2x8x128xf32>
      %cst = arith.constant dense<0x7F800000> : vector<8x128xf32>
      %15 = vector.multi_reduction <minimumf>, %14, %cst [0] : vector<2x8x128xf32> to vector<8x128xf32>
      %16 = vector.shape_cast %3 : vector<16x128xf32> to vector<2x8x128xf32>
      %cst_6 = arith.constant dense<0xFF800000> : vector<8x128xf32>
      %17 = vector.multi_reduction <maximumf>, %16, %cst_6 [0] : vector<2x8x128xf32> to vector<8x128xf32>
      %c0_7 = arith.constant 0 : index
      %c0_8 = arith.constant 0 : index
      %c0_9 = arith.constant 0 : index
      %18 = vector.load %arg3[%c0_7, %c0_8, %c0_9] : memref<1x8x128xf32, #tpu.memory_space<vmem>>, vector<1x8x128xf32>
      %19 = vector.shape_cast %18 : vector<1x8x128xf32> to vector<8x128xf32>
      %20 = arith.minimumf %19, %15 : vector<8x128xf32>
      %c0_10 = arith.constant 0 : index
      %c0_11 = arith.constant 0 : index
      %c0_12 = arith.constant 0 : index
      %21 = vector.load %arg3[%c0_10, %c0_11, %c0_12] : memref<1x8x128xf32, #tpu.memory_space<vmem>>, vector<1x8x128xf32>
      %22 = vector.shape_cast %21 : vector<1x8x128xf32> to vector<8x128xf32>
      %23 = vector.shape_cast %20 : vector<8x128xf32> to vector<1x8x128xf32>
      tpu.vector_store %arg3[%c0_10, %c0_11, %c0_12], %23 {strides = array<i32>} : memref<1x8x128xf32, #tpu.memory_space<vmem>>, vector<1x8x128xf32>,
      %c0_13 = arith.constant 0 : index
      %c0_14 = arith.constant 0 : index
      %c0_15 = arith.constant 0 : index
      %24 = vector.load %arg4[%c0_13, %c0_14, %c0_15] : memref<1x8x128xf32, #tpu.memory_space<vmem>>, vector<1x8x128xf32>
      %25 = vector.shape_cast %24 : vector<1x8x128xf32> to vector<8x128xf32>
      %26 = arith.maximumf %25, %17 : vector<8x128xf32>
      %c0_16 = arith.constant 0 : index
      %c0_17 = arith.constant 0 : index
      %c0_18 = arith.constant 0 : index
      %27 = vector.load %arg4[%c0_16, %c0_17, %c0_18] : memref<1x8x128xf32, #tpu.memory_space<vmem>>, vector<1x8x128xf32>
      %28 = vector.shape_cast %27 : vector<1x8x128xf32> to vector<8x128xf32>
      %29 = vector.shape_cast %26 : vector<8x128xf32> to vector<1x8x128xf32>
      tpu.vector_store %arg4[%c0_16, %c0_17, %c0_18], %29 {strides = array<i32>} : memref<1x8x128xf32, #tpu.memory_space<vmem>>, vector<1x8x128xf32>,
    } else {
    }
    return
  }
  func.func @transform_0(%arg0: i32, %arg1: i32) -> (i32, i32) {
    %c1_i32 = arith.constant 1 : i32
    %0 = arith.muli %arg0, %c1_i32 : i32
    %1 = arith.addi %0, %arg1 : i32
    %c0_i32 = arith.constant 0 : i32
    %2 = arith.minsi %1, %c0_i32 : i32
    %c0_i32_0 = arith.constant 0 : i32
    %c0_i32_1 = arith.constant 0 : i32
    return %2, %c0_i32_0 : i32, i32
  }
  func.func @transform_1(%arg0: i32, %arg1: i32) -> (i32, i32, i32) {
    %c0_i32 = arith.constant 0 : i32
    %c0_i32_0 = arith.constant 0 : i32
    %c0_i32_1 = arith.constant 0 : i32
    return %arg0, %c0_i32, %c0_i32_0 : i32, i32, i32
  }
  func.func @transform_2(%arg0: i32, %arg1: i32) -> (i32, i32, i32) {
    %c0_i32 = arith.constant 0 : i32
    %c0_i32_0 = arith.constant 0 : i32
    %c0_i32_1 = arith.constant 0 : i32
    return %arg0, %c0_i32, %c0_i32_0 : i32, i32, i32
  }
}

</mosaic_0001>

<llo_original>
// kernel: _ema_minmax_update.1
$region0: #{_ema_minmax_update.1}
  #allocation0 [shape = 'u32[]', space=smem, size = 0x4, offset = 0x4, fixed_abs, tag = 'smem constant byte address 0x4 - core index']
  #allocation1 [shape = 'u32[144,128]{1,0:T(1,128)}', space=vmem, size = 0x12000, scoped, tag = 'internal scratch']
  %s0 = inlined_call_operand.vmem [shape: f32[16,128], index: 0, kind: input, shape index: {}]
  %s1 = inlined_call_operand.vmem [shape: f32[1,8,128], index: 1, kind: output, shape index: {0}]
  %s2 = inlined_call_operand.vmem [shape: f32[1,8,128], index: 2, kind: output, shape index: {1}]
  %3 = xla_tuple %s1, %s2
  %s4 = sld [smem:[#allocation0]]
  $region34: #{_ema_minmax_update.1} parent=0
    _
  %s6 = ssub.s32 1, %s4
  %s7 = scalar_select 0, %s6, %s4
  // Predicated region
  $region2: #{_ema_minmax_update.1} parent=0 // pred_check
    _
  $region3: #{_ema_minmax_update.1} parent=0 // pred_check_branch
    %9 = sbr.rel (0) target = $region5
  $region4: #{_ema_minmax_update.1} parent=0 // pred_region
    %s10 = sadd.s32 0, 0
    %p11 = scmp.lt.s32.totalorder %s10, 0
    %s12 = scalar_select %p11, %s10, 0
    %s13 = smul.u32 2, %s12
    %p14 = scmp.lt.s32.totalorder %s13, 1
    %s15 = scalar_select %p14, %s13, 1
    %s16 = smul.addr %s15, 8
    %s17 = scalar_lea.vmem %s0, %s16
    %s18 = sadd.s32 0, 0
    %p19 = scmp.lt.s32.totalorder %s18, 0
    %s20 = scalar_select %p19, %s18, 0
    %s21 = smul.u32 2, %s20
  $region5: #{_ema_minmax_update.1} parent=0 // pred_fallthru
    _
  %s22 = sadd.s32 0, 0
  %p23 = scmp.lt.s32.totalorder %s22, 0
  %s24 = scalar_select %p23, %s22, 0
  %s25 = smul.u32 2, %s24
  %p26 = scmp.lt.s32.totalorder %s25, 1
  %s27 = scalar_select %p26, %s25, 1
  %s28 = smul.addr %s27, 8
  %s29 = scalar_lea.vmem %s0, %s28
  %s30 = sadd.s32 0, 0
  %p31 = scmp.lt.s32.totalorder %s30, 0
  %s32 = scalar_select %p31, %s30, 0
  %s33 = smul.u32 2, %s32
  %p34 = scmp.lt.s32.totalorder %s33, 1
  %s35 = scalar_select %p34, %s33, 1
  %s36 = smul.addr %s35, 8
  %s37 = scalar_lea.vmem %s0, %s36
  %s38 = sadd.s32 0, 0
  %p39 = scmp.lt.s32.totalorder %s38, 0
  %s40 = scalar_select %p39, %s38, 0
  %s41 = smul.u32 2, %s40
  %p42 = scmp.eq.s32.totalorder 0, 0
  // Predicated region
  $region6: #{_ema_minmax_update.1} parent=0 // pred_check
    %p43 = pneg %p42
  $region7: #{_ema_minmax_update.1} parent=0 // pred_check_branch
    %45 = sbr.rel (%p43) target = $region9
  $region8: #{_ema_minmax_update.1} parent=0 // pred_region
    %46 = vst [vmem:[%s1] sm:$0xff] inf
    %47 = vst [vmem:[%s2] sm:$0xff] -inf
  $region9: #{_ema_minmax_update.1} parent=0 // pred_fallthru
    _
  %v48 = vld [vmem:[%s37] sm:$0xff]
  %v49 = vld [vmem:[%s37 + $0x8] sm:$0xff]
  %s50 = sadd.s32 0, 0
  %s51 = smul.u32 %s50, 16
  %s52 = sadd.s32 %s51, 16
  %p53 = scmp.gt.s32.totalorder %s52, 16
  // Predicated region
  $region10: #{_ema_minmax_update.1} parent=0 // pred_check
    %p54 = pneg %p53
  $region11: #{_ema_minmax_update.1} parent=0 // pred_check_branch
    %56 = sbr.rel (%p54) target = $region13
  $region12: #{_ema_minmax_update.1} parent=0 // pred_region
    %v57 = vlaneseq
    %v58 = vshrl.u32 %v57, 7
    %v59 = vadd.s32 %v58, 8
    %v60 = vstv %s51
    %v61 = vadd.s32 %v60, %v58
    %v62 = vadd.s32 %v60, %v59
    %vm63 = vcmp.lt.s32.totalorder %v61, 16
    %vm64 = vcmp.lt.s32.totalorder %v62, 16
    %v65 = vsel %vm63, %v48, inf
    %v66 = vsel %vm64, %v49, inf
    %v67 = vsel %vm63, %v48, -inf
    %v68 = vsel %vm64, %v49, -inf
    %v69 = vmin.f32 %v65, %v66
    %v70 = vmax.f32 %v67, %v68
    %v71 = vld [vmem:[%s1] sm:$0xff]
    %v72 = vmin.f32 %v71, %v69
    %73 = vst [vmem:[%s1] sm:$0xff] %v72
    %v74 = vld [vmem:[%s2] sm:$0xff]
    %v75 = vmax.f32 %v74, %v70
    %76 = vst [vmem:[%s2] sm:$0xff] %v75
  $region13: #{_ema_minmax_update.1} parent=0 // pred_fallthru
    _
  %p77 = scmp.le.s32.totalorder %s52, 16
  // Predicated region
  $region14: #{_ema_minmax_update.1} parent=0 // pred_check
    %p78 = pneg %p77
  $region15: #{_ema_minmax_update.1} parent=0 // pred_check_branch
    %80 = sbr.rel (%p78) target = $region17
  $region16: #{_ema_minmax_update.1} parent=0 // pred_region
    %v81 = vmin.f32 %v48, %v49
    %v82 = vmax.f32 %v48, %v49
    %v83 = vld [vmem:[%s1] sm:$0xff]
    %v84 = vmin.f32 %v83, %v81
    %85 = vst [vmem:[%s1] sm:$0xff] %v84
    %v86 = vld [vmem:[%s2] sm:$0xff]
    %v87 = vmax.f32 %v86, %v82
    %88 = vst [vmem:[%s2] sm:$0xff] %v87
  $region17: #{_ema_minmax_update.1} parent=0 // pred_fallthru
    _
  // Predicated region
  $region18: #{_ema_minmax_update.1} parent=0 // pred_check
    _
  $region19: #{_ema_minmax_update.1} parent=0 // pred_check_branch
    %90 = sbr.rel (0) target = $region21
  $region20: #{_ema_minmax_update.1} parent=0 // pred_region
    _
  $region21: #{_ema_minmax_update.1} parent=0 // pred_fallthru
    _
  // Predicated region
  $region22: #{_ema_minmax_update.1} parent=0 // pred_check
    _
  $region23: #{_ema_minmax_update.1} parent=0 // pred_check_branch
    %92 = sbr.rel (0) target = $region25
  $region24: #{_ema_minmax_update.1} parent=0 // pred_region
    _
  $region25: #{_ema_minmax_update.1} parent=0 // pred_fallthru
    _
  // Predicated region
  $region26: #{_ema_minmax_update.1} parent=0 // pred_check
    _
  $region27: #{_ema_minmax_update.1} parent=0 // pred_check_branch
    %94 = sbr.rel (0) target = $region29
  $region28: #{_ema_minmax_update.1} parent=0 // pred_region
    _
  $region29: #{_ema_minmax_update.1} parent=0 // pred_fallthru
    _
  // Predicated region
  $region30: #{_ema_minmax_update.1} parent=0 // pred_check
    _
  $region31: #{_ema_minmax_update.1} parent=0 // pred_check_branch
    %96 = sbr.rel (0) target = $region33
  $region32: #{_ema_minmax_update.1} parent=0 // pred_region
    _
  $region33: #{_ema_minmax_update.1} parent=0 // pred_fallthru
    _

</llo_original>
